<compile_context>
chip_gen: v7x
topology: tpu7x:2x2x1
jax: 0.10.0
libtpu: 0.0.40
codegen_flags: <defaults>
</compile_context>

<pallas_src>
import functools

import jax
import jax.numpy as jnp
from jax import lax
from jax.experimental import pallas as pl
from jax.experimental.pallas import tpu as pltpu

LANES = 128
SUBLANES = 8
ACC_ROWS = 64          # accumulator rows per slab (8 vregs of ILP in the fold)
MAX_TILE_ROWS = 2048   # 2048x128 f32 block = 1 MiB/input; x2 inputs x2 buffers = 4 MiB
NUM_SLABS = 2          # leading "parallel" axis: both v7x TensorCores; harmless on 1-TC chips


def _cdiv(a, b):
    return -(-a // b)


def _round_up(x, m):
    return ((x + m - 1) // m) * m


def _sublane_multiple(dtype):
    """Min second-to-last block dim: 8 (4-byte), 16 (2-byte), 32 (1-byte)."""
    itemsize = jnp.dtype(dtype).itemsize
    return max(SUBLANES, (4 // itemsize) * SUBLANES)


def _lbhinge_sse_kernel(pred_ref, label_ref, acc_ref, *, threshold, rows,
                        tile_rows, acc_rows, n_inner, needs_mask):
    """Accumulate partial sums of squared hinge errors into this slab's
    (1, acc_rows, 128) output block (resident across the inner grid axis)."""
    i = pl.program_id(1)

    @pl.when(i == 0)
    def _():
        acc_ref[...] = jnp.zeros_like(acc_ref)

    pred = pred_ref[...].astype(jnp.float32)
    label = label_ref[...].astype(jnp.float32)

    # label <  threshold ("negative"): pred' = relu(pred), target = 0
    # label >= threshold ("positive"): pred' = pred,       target = label
    diff = jnp.where(label < threshold, jnp.maximum(pred, 0.0), pred - label)
    sq = diff * diff

    if needs_mask:
        # Ragged tail handled in-kernel: rows at/after the true row count
        # (partial last block, or a fully out-of-range clamped block) are
        # zeroed so they contribute nothing and are never double counted.
        start_row = (pl.program_id(0) * n_inner + i) * tile_rows
        row_ids = lax.broadcasted_iota(jnp.int32, (tile_rows, LANES), 0) + start_row
        sq = jnp.where(row_ids < rows, sq, 0.0)

    # Fold the tile onto the wide accumulator: pure VPU adds with acc_rows/8
    # independent vreg columns (no long serial dependency chain).
    folded = sq.reshape(tile_rows // acc_rows, acc_rows, LANES).sum(axis=0)
    acc_ref[...] += folded[None, :, :]


def lb_hinge_loss(prediction, label, *, threshold=-100.0, clip=None):
    """Pallas implementation of LBHinge.forward with the default MSE metric."""
    assert prediction.shape == label.shape, "prediction/label shape mismatch"
    n_elem = prediction.size
    assert n_elem > 0

    pred_flat = prediction.reshape(-1)
    label_flat = label.reshape(-1)

    # Rare path: element count not a multiple of 128 lanes -> pad only that
    # tail (<128 elements).  Zero pred/label lands on the `label >= threshold`
    # branch and contributes exactly 0; the mean divides by the true n_elem.
    if n_elem % LANES != 0:
        pad = LANES - n_elem % LANES
        pred_flat = jnp.pad(pred_flat, (0, pad))
        label_flat = jnp.pad(label_flat, (0, pad))
    rows = pred_flat.size // LANES

    pred2d = pred_flat.reshape(rows, LANES)
    label2d = label_flat.reshape(rows, LANES)

    sub_mult = max(_sublane_multiple(prediction.dtype),
                   _sublane_multiple(label.dtype))

    # Pick the tile: as large as possible (up to MAX_TILE_ROWS), respecting the
    # dtype's sublane packing and the accumulator fold granularity.
    rows_per_slab = _cdiv(rows, NUM_SLABS)
    if rows_per_slab >= MAX_TILE_ROWS:
        tile_rows = MAX_TILE_ROWS                       # multiple of 64 and of 8/16/32
    else:
        tile_rows = _round_up(rows_per_slab, sub_mult)
        if tile_rows > ACC_ROWS:
            tile_rows = _round_up(tile_rows, ACC_ROWS)  # keep the fold exact
    acc_rows = min(ACC_ROWS, tile_rows)

    # Tiny-input safety: if the whole array is smaller than one tile, pad the
    # few missing rows (zeros, loss-neutral) so the block never exceeds the array.
    if rows < tile_rows:
        pad_rows = tile_rows - rows
        pred2d = jnp.pad(pred2d, ((0, pad_rows), (0, 0)))
        label2d = jnp.pad(label2d, ((0, pad_rows), (0, 0)))

    num_tiles = _cdiv(rows, tile_rows)
    n_inner = _cdiv(num_tiles, NUM_SLABS)
    needs_mask = (NUM_SLABS * n_inner * tile_rows) != rows

    def in_map(c, i):
        # Clamp trailing out-of-range blocks onto the last real block; their
        # contribution is fully masked to zero inside the kernel.
        return (jnp.minimum(c * n_inner + i, num_tiles - 1), 0)

    kernel = functools.partial(
        _lbhinge_sse_kernel,
        threshold=float(threshold), rows=rows, tile_rows=tile_rows,
        acc_rows=acc_rows, n_inner=n_inner, needs_mask=needs_mask)

    partial = pl.pallas_call(
        kernel,
        out_shape=jax.ShapeDtypeStruct((NUM_SLABS, acc_rows, LANES), jnp.float32),
        grid=(NUM_SLABS, n_inner),
        in_specs=[
            pl.BlockSpec((tile_rows, LANES), in_map),
            pl.BlockSpec((tile_rows, LANES), in_map),
        ],
        out_specs=pl.BlockSpec((1, acc_rows, LANES), lambda c, i: (c, 0, 0)),
        compiler_params=pltpu.CompilerParams(
            # slab axis parallel (v7x megacore), reduction axis arbitrary
            dimension_semantics=("parallel", "arbitrary"),
        ),
    )(pred2d, label2d)

    loss = jnp.sum(partial) / jnp.float32(n_elem)  # nn.MSELoss default = mean
    if clip is not None:
        loss = jnp.minimum(loss, jnp.float32(clip))
    return loss


def _reference_lb_hinge(prediction, label, threshold=-100.0, clip=None):
    """Pure-JAX reference mirroring the PyTorch module."""
    negative_mask = (label < threshold).astype(jnp.float32)
    positive_mask = 1.0 - negative_mask
    pred = negative_mask * jnp.maximum(prediction, 0.0) + positive_mask * prediction
    loss = jnp.mean((pred - positive_mask * label) ** 2)
    if clip is not None:
        loss = jnp.minimum(loss, jnp.float32(clip))
    return loss


if __name__ == "__main__":
    key = jax.random.PRNGKey(0)
    k_pred, k_label = jax.random.split(key)

    threshold = -100.0
    clip = 4.0

    # Main case: typical classification score maps [B, C, H, W].
    B, C, H, W = 2, 4, 16, 16
    prediction = jax.random.normal(k_pred, (B, C, H, W), dtype=jnp.float32)
    label = jax.random.normal(k_label, (B, C, H, W), dtype=jnp.float32)
    # Push some labels far negative so the hinge branch (label < threshold) fires.
    label = jnp.where(label < -1.0, label * 200.0, label)

    loss = lb_hinge_loss(prediction, label, threshold=threshold, clip=clip)
    loss = jax.block_until_ready(loss)
    ref = _reference_lb_hinge(prediction, label, threshold=threshold, clip=clip)
    assert jnp.allclose(loss, ref, rtol=1e-5, atol=1e-6), (loss, ref)

    # Extra case: row count not a tile multiple -> exercises the in-kernel
    # ragged-tail mask + partial last block (no wrapper padding needed).
    p2 = jax.random.normal(k_pred, (2, 4, 40, 16), dtype=jnp.float32)
    l2 = jax.random.normal(k_label, (2, 4, 40, 16), dtype=jnp.float32)
    l2 = jnp.where(l2 < -1.0, l2 * 200.0, l2)
    loss2 = jax.block_until_ready(lb_hinge_loss(p2, l2, threshold=threshold, clip=clip))
    ref2 = _reference_lb_hinge(p2, l2, threshold=threshold, clip=clip)
    assert jnp.allclose(loss2, ref2, rtol=1e-5, atol=1e-6), (loss2, ref2)

    # Extra case: tiny ragged input (105 elements) -> lane-tail pad + row pad +
    # clamped/fully-masked trailing block.
    p3 = jax.random.normal(k_pred, (3, 5, 7), dtype=jnp.float32)
    l3 = jax.random.normal(k_label, (3, 5, 7), dtype=jnp.float32) * 150.0
    loss3 = jax.block_until_ready(lb_hinge_loss(p3, l3, threshold=threshold, clip=None))
    ref3 = _reference_lb_hinge(p3, l3, threshold=threshold, clip=None)
    assert jnp.allclose(loss3, ref3, rtol=1e-5, atol=1e-6), (loss3, ref3)

    print("KERNEL_OK")
</pallas_src>

<mosaic_0001>
module attributes {stable_mosaic.version = 11 : i64} {
  func.func @_lbhinge_sse_kernel(%arg0: i32, %arg1: i32, %arg2: memref<8x128xf32, #tpu.memory_space<vmem>>, %arg3: memref<8x128xf32, #tpu.memory_space<vmem>>, %arg4: memref<1x8x128xf32, #tpu.memory_space<vmem>>) attributes {dimension_semantics = [#tpu.dimension_semantics<parallel>, #tpu.dimension_semantics<arbitrary>], iteration_bounds = array<i64: 2, 1>, scalar_prefetch = 0 : i64, scratch_operands = 0 : i64, tpu.core_type = #tpu.core_type<tc>, window_params = [{transform_indices = @transform_0, window_bounds = array<i64: 8, 128>}, {transform_indices = @transform_1, window_bounds = array<i64: 8, 128>}, {transform_indices = @transform_2, window_bounds = array<i64: 1, 8, 128>}]} {
    %c0_i32 = arith.constant 0 : i32
    %0 = arith.cmpi eq, %arg1, %c0_i32 : i32
    %1 = arith.extui %0 : i1 to i32
    %c0_i32_0 = arith.constant 0 : i32
    %2 = arith.cmpi ne, %1, %c0_i32_0 : i32
    scf.if %2 {
      %cst_12 = arith.constant 0.000000e+00 : f32
      %18 = vector.broadcast %cst_12 : f32 to vector<1x8x128xf32>
      %c0_13 = arith.constant 0 : index
      %c0_14 = arith.constant 0 : index
      %c0_15 = arith.constant 0 : index
      %19 = vector.load %arg4[%c0_13, %c0_14, %c0_15] : memref<1x8x128xf32, #tpu.memory_space<vmem>>, vector<1x8x128xf32>
      tpu.vector_store %arg4[%c0_13, %c0_14, %c0_15], %18 {strides = array<i32>} : memref<1x8x128xf32, #tpu.memory_space<vmem>>, vector<1x8x128xf32>,
    } else {
    }
    %c0 = arith.constant 0 : index
    %c0_1 = arith.constant 0 : index
    %3 = vector.load %arg2[%c0, %c0_1] : memref<8x128xf32, #tpu.memory_space<vmem>>, vector<8x128xf32>
    %c0_2 = arith.constant 0 : index
    %c0_3 = arith.constant 0 : index
    %4 = vector.load %arg3[%c0_2, %c0_3] : memref<8x128xf32, #tpu.memory_space<vmem>>, vector<8x128xf32>
    %cst = arith.constant -1.000000e+02 : f32
    %5 = vector.broadcast %cst : f32 to vector<8x128xf32>
    %6 = arith.cmpf olt, %4, %5 : vector<8x128xf32>
    %cst_4 = arith.constant 0.000000e+00 : f32
    %7 = vector.broadcast %cst_4 : f32 to vector<8x128xf32>
    %8 = arith.maximumf %3, %7 : vector<8x128xf32>
    %9 = arith.subf %3, %4 : vector<8x128xf32>
    %10 = arith.select %6, %8, %9 : vector<8x128xi1>, vector<8x128xf32>
    %11 = arith.mulf %10, %10 : vector<8x128xf32>
    %12 = vector.shape_cast %11 : vector<8x128xf32> to vector<1x8x128xf32>
    %cst_5 = arith.constant dense<0.000000e+00> : vector<8x128xf32>
    %13 = vector.multi_reduction <add>, %12, %cst_5 [0] : vector<1x8x128xf32> to vector<8x128xf32>
    %c0_6 = arith.constant 0 : index
    %c0_7 = arith.constant 0 : index
    %c0_8 = arith.constant 0 : index
    %14 = vector.load %arg4[%c0_6, %c0_7, %c0_8] : memref<1x8x128xf32, #tpu.memory_space<vmem>>, vector<1x8x128xf32>
    %15 = vector.shape_cast %13 : vector<8x128xf32> to vector<1x8x128xf32>
    %16 = arith.addf %14, %15 : vector<1x8x128xf32>
    %c0_9 = arith.constant 0 : index
    %c0_10 = arith.constant 0 : index
    %c0_11 = arith.constant 0 : index
    %17 = vector.load %arg4[%c0_9, %c0_10, %c0_11] : memref<1x8x128xf32, #tpu.memory_space<vmem>>, vector<1x8x128xf32>
    tpu.vector_store %arg4[%c0_9, %c0_10, %c0_11], %16 {strides = array<i32>} : memref<1x8x128xf32, #tpu.memory_space<vmem>>, vector<1x8x128xf32>,
    return
  }
  func.func @transform_0(%arg0: i32, %arg1: i32) -> (i32, i32) {
    %c1_i32 = arith.constant 1 : i32
    %0 = arith.muli %arg0, %c1_i32 : i32
    %1 = arith.addi %0, %arg1 : i32
    %c1_i32_0 = arith.constant 1 : i32
    %2 = arith.minsi %1, %c1_i32_0 : i32
    %c0_i32 = arith.constant 0 : i32
    %c0_i32_1 = arith.constant 0 : i32
    return %2, %c0_i32 : i32, i32
  }
  func.func @transform_1(%arg0: i32, %arg1: i32) -> (i32, i32) {
    %c1_i32 = arith.constant 1 : i32
    %0 = arith.muli %arg0, %c1_i32 : i32
    %1 = arith.addi %0, %arg1 : i32
    %c1_i32_0 = arith.constant 1 : i32
    %2 = arith.minsi %1, %c1_i32_0 : i32
    %c0_i32 = arith.constant 0 : i32
    %c0_i32_1 = arith.constant 0 : i32
    return %2, %c0_i32 : i32, i32
  }
  func.func @transform_2(%arg0: i32, %arg1: i32) -> (i32, i32, i32) {
    %c0_i32 = arith.constant 0 : i32
    %c0_i32_0 = arith.constant 0 : i32
    %c0_i32_1 = arith.constant 0 : i32
    return %arg0, %c0_i32, %c0_i32_0 : i32, i32, i32
  }
}

</mosaic_0001>

<llo_original>
// kernel: tpu_custom_call.1
$region0: #{tpu_custom_call.1}
  #allocation0 [shape = 'u32[]', space=smem, size = 0x4, offset = 0x4, fixed_abs, tag = 'smem constant byte address 0x4 - core index']
  #allocation1 [shape = 'u32[144,128]{1,0:T(1,128)}', space=vmem, size = 0x12000, scoped, tag = 'internal scratch']
  %s0 = inlined_call_operand.hbm [shape: f32[16,128], index: 0, kind: input, shape index: {}]
  %s1 = inlined_call_operand.hbm [shape: f32[16,128], index: 1, kind: input, shape index: {}]
  %s2 = inlined_call_operand.hbm [shape: f32[2,8,128], index: 2, kind: output, shape index: {}]
  %s3 = sld [smem:[#allocation0]]
  $region53: #{tpu_custom_call.1} parent=0
    _
  %s5 = ssub.s32 1, %s3
  %s6 = scalar_select 0, %s5, %s3
  $region1: #{tpu_custom_call.1} parent=0
    #allocation2 [shape = 'u8[8192]{0}', space=vmem, size = 0x2000, scoped, tag = 'input window, operand 0']
    #allocation3 [shape = 's32[2]{0}', space=sflag, size = 0x8, scoped, tag = 'scoped memory for tpu_custom_call.1']
    #allocation4 [shape = 's32[2]{0}', space=sflag, size = 0x8, scoped, tag = 'scoped memory for tpu_custom_call.1']
    #allocation5 [shape = 'u8[8192]{0}', space=vmem, size = 0x2000, scoped, tag = 'input window, operand 1']
    #allocation6 [shape = 's32[2]{0}', space=sflag, size = 0x8, scoped, tag = 'scoped memory for tpu_custom_call.1']
    #allocation7 [shape = 'u8[8192]{0}', space=vmem, size = 0x2000, scoped, tag = 'output window, operand 0']
    %7 = vsyncpa [#allocation3], 0
    %s8 = scalar_lea.sflag [#allocation3], 1
    %9 = vsyncpa %s8, 0
    %10 = vsyncpa [#allocation6], 0
    %s11 = scalar_lea.sflag [#allocation6], 1
    %12 = vsyncpa %s11, 0
    %13 = vsyncpa [#allocation4], 0
    %s14 = scalar_lea.sflag [#allocation4], 1
    %15 = vsyncpa %s14, 0
    loop: start=0, step=1, limit=4
    $region2: #{tpu_custom_call.1} parent=1 // loop_pre_header
      _
    $region3: #{tpu_custom_call.1} parent=1 // loop_header
      %s17 = sphi 0, %s21
      %p18 = scmp.ge.s32.totalorder %s17, 4
      %s24 = sphi 0, %s36
      %s25 = sphi 0, %s32
      %s26 = sphi 0, %s24
      %s27 = sphi 0, %s25
      %s28 = sphi 0, %s26
      %s29 = sphi 0, %s27
      %s45 = sphi 0, %s47
      %s48 = sphi 0, %s45
      %s49 = sphi 0, %s48
      %s65 = sphi 0, %s49
      %s77 = sphi 0, %s79
      %s80 = sphi 0, %s77
      %s81 = sphi 0, %s80
      %s97 = sphi 0, %s81
      %s103 = sphi 0, %s105
      %s106 = sphi 0, %s103
      %s107 = sphi 0, %s106
      %s123 = sphi 0, %s107
    $region4: #{tpu_custom_call.1} parent=1 // loop_header_branch
      %20 = sbr.rel (%p18) target = $region8
    $region5: #{tpu_custom_call.1} parent=1 // loop_body
      %s22 = ssub.s32 %s17, 1
      %s23 = ssub.s32 %s17, 2
      %s30 = sadd.s32 1, %s25
      %p31 = scmp.ge.s32.totalorder %s30, 1
      %s32 = scalar_select %p31, 0, %s30
      %s33 = sadd.s32 1, %s24
      %s34 = scalar_select %p31, %s33, %s24
      %p35 = scmp.ge.s32.totalorder %s34, 2
      %s36 = scalar_select %p35, 0, %s34
      %s37 = sadd.s32 %s24, %s25
      %p38 = scmp.lt.s32.totalorder %s37, 1
      %s39 = scalar_select %p38, %s37, 1
      %s40 = sadd.s32 %s36, %s32
      %p41 = scmp.lt.s32.totalorder %s40, 1
      %s42 = scalar_select %p41, %s40, 1
      %s43 = ssub.s32 %s39, %s42
      %p44 = scmp.eq.s32.totalorder %s43, 0
      %s46 = sadd.s32 %s45, 1
      %s47 = scalar_select %p44, %s45, %s46
      %p50 = pneg %p44
      %p51 = scmp.eq.s32.totalorder %s17, 1
      %p52 = por %p50, %p51
      %p53 = scmp.ne.s32.totalorder %s45, %s48
      %p54 = scmp.eq.s32.totalorder %s17, 0
      %p55 = por %p53, %p54
      %p56 = scmp.ne.s32.totalorder %s45, %s48
      %p57 = scmp.eq.s32.totalorder %s22, 1
      %p58 = por %p56, %p57
      %p59 = scmp.ne.s32.totalorder %s48, %s49
      %p60 = scmp.eq.s32.totalorder %s22, 0
      %p61 = por %p59, %p60
      %p62 = scmp.ne.s32.totalorder %s48, %s49
      %p63 = scmp.eq.s32.totalorder %s23, 1
      %p64 = por %p62, %p63
      %p66 = scmp.ne.s32.totalorder %s49, %s65
      %p67 = scmp.eq.s32.totalorder %s23, 0
      %p68 = por %p66, %p67
      %s69 = sadd.s32 %s24, %s25
      %p70 = scmp.lt.s32.totalorder %s69, 1
      %s71 = scalar_select %p70, %s69, 1
      %s72 = sadd.s32 %s36, %s32
      %p73 = scmp.lt.s32.totalorder %s72, 1
      %s74 = scalar_select %p73, %s72, 1
      %s75 = ssub.s32 %s71, %s74
      %p76 = scmp.eq.s32.totalorder %s75, 0
      %s78 = sadd.s32 %s77, 1
      %s79 = scalar_select %p76, %s77, %s78
      %p82 = pneg %p76
      %p83 = scmp.eq.s32.totalorder %s17, 1
      %p84 = por %p82, %p83
      %p85 = scmp.ne.s32.totalorder %s77, %s80
      %p86 = scmp.eq.s32.totalorder %s17, 0
      %p87 = por %p85, %p86
      %p88 = scmp.ne.s32.totalorder %s77, %s80
      %p89 = scmp.eq.s32.totalorder %s22, 1
      %p90 = por %p88, %p89
      %p91 = scmp.ne.s32.totalorder %s80, %s81
      %p92 = scmp.eq.s32.totalorder %s22, 0
      %p93 = por %p91, %p92
      %p94 = scmp.ne.s32.totalorder %s80, %s81
      %p95 = scmp.eq.s32.totalorder %s23, 1
      %p96 = por %p94, %p95
      %p98 = scmp.ne.s32.totalorder %s81, %s97
      %p99 = scmp.eq.s32.totalorder %s23, 0
      %p100 = por %p98, %p99
      %s101 = ssub.s32 %s24, %s36
      %p102 = scmp.eq.s32.totalorder %s101, 0
      %s104 = sadd.s32 %s103, 1
      %s105 = scalar_select %p102, %s103, %s104
      %p108 = pneg %p102
      %p109 = scmp.eq.s32.totalorder %s17, 1
      %p110 = por %p108, %p109
      %p111 = scmp.ne.s32.totalorder %s103, %s106
      %p112 = scmp.eq.s32.totalorder %s17, 0
      %p113 = por %p111, %p112
      %p114 = scmp.ne.s32.totalorder %s103, %s106
      %p115 = scmp.eq.s32.totalorder %s22, 1
      %p116 = por %p114, %p115
      %p117 = scmp.ne.s32.totalorder %s106, %s107
      %p118 = scmp.eq.s32.totalorder %s22, 0
      %p119 = por %p117, %p118
      %p120 = scmp.ne.s32.totalorder %s106, %s107
      %p121 = scmp.eq.s32.totalorder %s23, 1
      %p122 = por %p120, %p121
      %p124 = scmp.ne.s32.totalorder %s107, %s123
      %p125 = scmp.eq.s32.totalorder %s23, 0
      %p126 = por %p124, %p125
      %p127 = scmp.le.s32.totalorder 1, %s17
      %p128 = scmp.lt.s32.totalorder %s17, 3
      %p129 = pnand %p127, %p128
      %p130 = pneg %p129
      // Predicated region
      $region9: #{tpu_custom_call.1} parent=5 // pred_check
        _
      $region10: #{tpu_custom_call.1} parent=5 // pred_check_branch
        %132 = sbr.rel (%p129) target = $region12
      $region11: #{tpu_custom_call.1} parent=5 // pred_region
        %s133 = ssub.s32 %s17, 1
      $region12: #{tpu_custom_call.1} parent=5 // pred_fallthru
        _
      %p134 = scmp.lt.s32.totalorder %s17, 2
      // Predicated region
      $region13: #{tpu_custom_call.1} parent=5 // pred_check
        %p135 = pneg %p134
      $region14: #{tpu_custom_call.1} parent=5 // pred_check_branch
        %137 = sbr.rel (%p135) target = $region16
      $region15: #{tpu_custom_call.1} parent=5 // pred_region
        // Predicated region
        $region17: #{tpu_custom_call.1} parent=15 // pred_check
          %p138 = pneg %p55
        $region18: #{tpu_custom_call.1} parent=15 // pred_check_branch
          %140 = sbr.rel (%p138) target = $region20
        $region19: #{tpu_custom_call.1} parent=15 // pred_region
          %s141 = sand.u32 %s45, 1
          %s142 = scalar_lea.sflag [#allocation3], %s141
          %s143 = sand.u32 %s45, 1
          %s144 = smul.addr %s143, 8
          %s145 = scalar_lea.vmem [#allocation2], %s144
          %s146 = sadd.s32 %s24, %s25
          %p147 = scmp.lt.s32.totalorder %s146, 1
          %s148 = scalar_select %p147, %s146, 1
          %s150 = ssub.s32 128, 128
          %151 = vsyncadd %s142, %s150
          %s152 = smul.addr %s148, 128
          %s153 = scalar_lea.hbm %s0, %s152
          %s155 = sshll.u32 %s145, 4
          %s156 = int_to_ptr.vmem [resolvable:$true] %s155
          %158 = dma.hbm_to_vmem [thread:$0]  %s153, 128, %s156, %s142
        $region20: #{tpu_custom_call.1} parent=15 // pred_fallthru
          _
        // Predicated region
        $region21: #{tpu_custom_call.1} parent=15 // pred_check
          %p159 = pneg %p87
        $region22: #{tpu_custom_call.1} parent=15 // pred_check_branch
          %161 = sbr.rel (%p159) target = $region24
        $region23: #{tpu_custom_call.1} parent=15 // pred_region
          %s162 = sand.u32 %s77, 1
          %s163 = scalar_lea.sflag [#allocation6], %s162
          %s164 = sand.u32 %s77, 1
          %s165 = smul.addr %s164, 8
          %s166 = scalar_lea.vmem [#allocation5], %s165
          %s167 = sadd.s32 %s24, %s25
          %p168 = scmp.lt.s32.totalorder %s167, 1
          %s169 = scalar_select %p168, %s167, 1
          %s171 = ssub.s32 128, 128
          %172 = vsyncadd %s163, %s171
          %s173 = smul.addr %s169, 128
          %s174 = scalar_lea.hbm %s1, %s173
          %s176 = sshll.u32 %s166, 4
          %s177 = int_to_ptr.vmem [resolvable:$true] %s176
          %179 = dma.hbm_to_vmem [thread:$0]  %s174, 128, %s177, %s163
        $region24: #{tpu_custom_call.1} parent=15 // pred_fallthru
          _
      $region16: #{tpu_custom_call.1} parent=5 // pred_fallthru
        _
      %p180 = scmp.le.s32.totalorder 1, %s17
      %p181 = scmp.lt.s32.totalorder %s17, 3
      %p182 = pnand %p180, %p181
      %p183 = pneg %p182
      // Predicated region
      $region25: #{tpu_custom_call.1} parent=5 // pred_check
        _
      $region26: #{tpu_custom_call.1} parent=5 // pred_check_branch
        %185 = sbr.rel (%p182) target = $region28
      $region27: #{tpu_custom_call.1} parent=5 // pred_region
        %s186 = ssub.s32 %s17, 1
        %s187 = sand.u32 %s48, 1
        %s188 = scalar_lea.sflag [#allocation3], %s187
        %s189 = sand.u32 %s48, 1
        %s190 = smul.addr %s189, 8
        %s191 = scalar_lea.vmem [#allocation2], %s190
        // Predicated region
        $region29: #{tpu_custom_call.1} parent=27 // pred_check
          %p192 = pneg %p61
        $region30: #{tpu_custom_call.1} parent=27 // pred_check_branch
          %194 = sbr.rel (%p192) target = $region32
        $region31: #{tpu_custom_call.1} parent=27 // pred_region
          %195 = dma.done %s188, 128
        $region32: #{tpu_custom_call.1} parent=27 // pred_fallthru
          _
        %s196 = sand.u32 %s80, 1
        %s197 = scalar_lea.sflag [#allocation6], %s196
        %s198 = sand.u32 %s80, 1
        %s199 = smul.addr %s198, 8
        %s200 = scalar_lea.vmem [#allocation5], %s199
        // Predicated region
        $region33: #{tpu_custom_call.1} parent=27 // pred_check
          %p201 = pneg %p93
        $region34: #{tpu_custom_call.1} parent=27 // pred_check_branch
          %203 = sbr.rel (%p201) target = $region36
        $region35: #{tpu_custom_call.1} parent=27 // pred_region
          %204 = dma.done %s197, 128
        $region36: #{tpu_custom_call.1} parent=27 // pred_fallthru
          _
        %s205 = sand.u32 %s48, 1
        %s206 = scalar_lea.sflag [#allocation3], %s205
        %s207 = sand.u32 %s48, 1
        %s208 = smul.addr %s207, 8
        %s209 = scalar_lea.vmem [#allocation2], %s208
        %p210 = pneg %p61
        %p211 = pneg %p58
        %s212 = sand.u32 %s80, 1
        %s213 = scalar_lea.sflag [#allocation6], %s212
        %s214 = sand.u32 %s80, 1
        %s215 = smul.addr %s214, 8
        %s216 = scalar_lea.vmem [#allocation5], %s215
        %p217 = pneg %p93
        %p218 = pneg %p90
        %p219 = pneg %p119
        %p220 = pneg %p116
        %s221 = sand.u32 %s106, 1
        %s222 = scalar_lea.sflag [#allocation4], %s221
        %s223 = sand.u32 %s106, 1
        %s224 = smul.addr %s223, 8
        %s225 = scalar_lea.vmem [#allocation7], %s224
        %s226 = sadd.s32 %s26, %s27
        %p227 = scmp.lt.s32.totalorder %s226, 1
        %s228 = scalar_select %p227, %s226, 1
        %s229 = sadd.s32 %s26, %s27
        %p230 = scmp.lt.s32.totalorder %s229, 1
        %s231 = scalar_select %p230, %s229, 1
        %p232 = scmp.eq.s32.totalorder %s27, 0
        // Predicated region
        $region37: #{tpu_custom_call.1} parent=27 // pred_check
          %p233 = pneg %p232
        $region38: #{tpu_custom_call.1} parent=27 // pred_check_branch
          %235 = sbr.rel (%p233) target = $region40
        $region39: #{tpu_custom_call.1} parent=27 // pred_region
          %236 = vst [vmem:[%s225] sm:$0xff] 0.0
        $region40: #{tpu_custom_call.1} parent=27 // pred_fallthru
          _
        %v237 = vld [vmem:[%s191] sm:$0xff]
        %v238 = vld [vmem:[%s200] sm:$0xff]
        %vm239 = vcmp.lt.f32.partialorder %v238, -100.0
        %v240 = vmax.f32 %v237, 0.0
        %v241 = vsub.f32 %v237, %v238
        %v242 = vsel %vm239, %v240, %v241
        %v243 = vmul.f32 %v242, %v242
        %v244 = vadd.f32 %v243, 0.0
        %v245 = vld [vmem:[%s225] sm:$0xff]
        %v246 = vadd.f32 %v245, %v244
        %247 = vst [vmem:[%s225] sm:$0xff] %v246
        %s248 = sand.u32 %s106, 1
        %s249 = scalar_lea.sflag [#allocation4], %s248
        %s250 = sand.u32 %s106, 1
        %s251 = smul.addr %s250, 8
        %s252 = scalar_lea.vmem [#allocation7], %s251
        // Predicated region
        $region41: #{tpu_custom_call.1} parent=27 // pred_check
          %p253 = pneg %p116
        $region42: #{tpu_custom_call.1} parent=27 // pred_check_branch
          %255 = sbr.rel (%p253) target = $region44
        $region43: #{tpu_custom_call.1} parent=27 // pred_region
          %s257 = ssub.s32 128, 128
          %258 = vsyncadd %s249, %s257
          %s259 = smul.addr %s26, 128
          %s260 = scalar_lea.hbm %s2, %s259
          %s262 = sshll.u32 %s252, 4
          %s263 = int_to_ptr.vmem [resolvable:$true] %s262
          %265 = dma.vmem_to_hbm [thread:$0]  %s263, 128, %s260, %s249
        $region44: #{tpu_custom_call.1} parent=27 // pred_fallthru
          _
      $region28: #{tpu_custom_call.1} parent=5 // pred_fallthru
        _
      %p266 = scmp.le.s32.totalorder 2, %s17
      // Predicated region
      $region45: #{tpu_custom_call.1} parent=5 // pred_check
        %p267 = pneg %p266
      $region46: #{tpu_custom_call.1} parent=5 // pred_check_branch
        %269 = sbr.rel (%p267) target = $region48
      $region47: #{tpu_custom_call.1} parent=5 // pred_region
        %s270 = ssub.s32 %s17, 2
        // Predicated region
        $region49: #{tpu_custom_call.1} parent=47 // pred_check
          %p271 = pneg %p122
        $region50: #{tpu_custom_call.1} parent=47 // pred_check_branch
          %273 = sbr.rel (%p271) target = $region52
        $region51: #{tpu_custom_call.1} parent=47 // pred_region
          %s274 = sand.u32 %s107, 1
          %s275 = scalar_lea.sflag [#allocation4], %s274
          %s276 = sand.u32 %s107, 1
          %s277 = smul.addr %s276, 8
          %s278 = scalar_lea.vmem [#allocation7], %s277
          %279 = dma.done %s275, 128
        $region52: #{tpu_custom_call.1} parent=47 // pred_fallthru
          _
      $region48: #{tpu_custom_call.1} parent=5 // pred_fallthru
        _
    $region6: #{tpu_custom_call.1} parent=1 // loop_footer
      %s21 = sadd.s32 1, %s17
    $region7: #{tpu_custom_call.1} parent=1 // loop_footer_branch
      %16 = sbr.rel target = $region3
    $region8: #{tpu_custom_call.1} parent=1 // loop_exit
      _
    %280 = vsyncpa [#allocation3], 1
    %s281 = scalar_lea.sflag [#allocation3], 1
    %282 = vsyncpa %s281, 1
    %283 = vsyncpa [#allocation6], 1
    %s284 = scalar_lea.sflag [#allocation6], 1
    %285 = vsyncpa %s284, 1
    %286 = vsyncpa [#allocation4], 1
    %s287 = scalar_lea.sflag [#allocation4], 1
    %288 = vsyncpa %s287, 1

</llo_original>
